<compile_context>
chip_gen: v5e
topology: v5e:2x2
jax: 0.10.0
libtpu: 0.0.40
codegen_flags: <defaults>
</compile_context>

<pallas_src>
import functools

import jax
import jax.numpy as jnp
from jax.experimental import pallas as pl
from jax.experimental.pallas import tpu as pltpu

_MIB = 1024 * 1024


def _round_up(v, m):
    return (v + m - 1) // m * m


def _vmem_capacity_bytes():
    """Per-core physical VMEM (128 MiB v5e/v6e, 64 MiB v7x); conservative fallback."""
    try:
        return int(pltpu.get_tpu_info().vmem_capacity_bytes)
    except Exception:  # noqa: BLE001 - fall back to the smallest generation
        return 64 * _MIB


def _pick_tile_m(n, c, itemsize, budget_bytes, min_steps=4, max_tile=1024):
    """Largest multiple-of-8 row tile whose working set fits the budget, capped so
    the 1-D grid has >= min_steps steps (pipelining + v7x megacore sharding)."""
    # Bytes per row: double-buffered input block + ~3 f32-wide intermediates
    # (x_f32 / z / exp(z)) that get materialized between the row reductions.
    per_row = 2 * c * itemsize + 3 * c * 4
    tile = budget_bytes // max(per_row, 1)
    tile = max(8, min(max_tile, (tile // 8) * 8))
    # Guarantee >= min_steps grid steps when the batch allows it (>= 2 per core
    # on v7x, and DMA/compute overlap on all generations).
    tile = min(tile, max(8, _round_up(pl.cdiv(n, min_steps), 8)))
    # Never tile beyond the (8-rounded) batch itself.
    tile = max(8, min(tile, _round_up(n, 8)))
    # Prefer an even number of grid steps so the two v7x cores stay balanced.
    steps = pl.cdiv(n, tile)
    if steps > 1 and steps % 2 == 1:
        alt = max(8, _round_up(pl.cdiv(n, steps + 1), 8))
        if pl.cdiv(n, alt) % 2 == 0:
            tile = alt
    return tile


def _label_smoothing_kernel(x_ref, t_ref, loss_ref, *,
                            confidence, smoothing, inv_num_classes):
    # x block: (TM, C); target block: (TM, 1) int32; output block: (TM, 1) f32.
    # Math stays in f32 regardless of the input dtype (v5e VPU/EUP lack bf16).
    x = x_ref[...].astype(jnp.float32)                           # (TM, C)
    m = jnp.max(x, axis=-1, keepdims=True)                       # (TM, 1)
    z = x - m
    lse = jnp.log(jnp.sum(jnp.exp(z), axis=-1, keepdims=True))   # (TM, 1)

    tgt = t_ref[...]                                             # (TM, 1) int32
    col = jax.lax.broadcasted_iota(jnp.int32, z.shape, 1)        # (TM, C)
    z_tgt = jnp.sum(jnp.where(col == tgt, z, 0.0), axis=-1, keepdims=True)
    sum_z = jnp.sum(z, axis=-1, keepdims=True)

    nll_loss = lse - z_tgt                                       # -logp[target]
    smooth_loss = lse - sum_z * inv_num_classes                  # -mean(logp)
    loss_ref[...] = confidence * nll_loss + smoothing * smooth_loss


def label_smoothing_loss(x, target, smoothing=0.0, tile_m=None):
    """x: (N, C) float logits (f32 or bf16); target: (N,) int class indices.
    Returns the scalar mean smoothed-NLL loss (matches the PyTorch module)."""
    n, c = x.shape
    confidence = 1.0 - smoothing
    itemsize = jnp.dtype(x.dtype).itemsize

    vmem_cap = _vmem_capacity_bytes()
    # ~10 MiB x-tile budget on v7x (64 MiB VMEM), ~21 MiB on v5e/v6e (128 MiB).
    budget = max(8 * _MIB, min(24 * _MIB, vmem_cap // 6))

    if tile_m is None:
        tile_m = _pick_tile_m(n, c, itemsize, budget)
    tile_m = max(8, _round_up(int(tile_m), 8))

    num_tiles = pl.cdiv(n, tile_m)
    n_out = num_tiles * tile_m          # output is padded; inputs are NOT copied

    target2d = target.astype(jnp.int32).reshape(n, 1)

    kernel = functools.partial(
        _label_smoothing_kernel,
        confidence=float(confidence),
        smoothing=float(smoothing),
        inv_num_classes=1.0 / float(c),
    )

    cost = pl.CostEstimate(
        flops=8 * n * c,
        transcendentals=n * c,
        bytes_accessed=n * c * itemsize + n * 4 + n_out * 4,
    )

    per_row = pl.pallas_call(
        kernel,
        out_shape=jax.ShapeDtypeStruct((n_out, 1), jnp.float32),
        grid_spec=pltpu.PrefetchScalarGridSpec(
            num_scalar_prefetch=0,
            grid=(num_tiles,),
            in_specs=[
                pl.BlockSpec((tile_m, c), lambda i: (i, 0)),
                pl.BlockSpec((tile_m, 1), lambda i: (i, 0)),
            ],
            out_specs=pl.BlockSpec((tile_m, 1), lambda i: (i, 0)),
        ),
        compiler_params=pltpu.CompilerParams(
            dimension_semantics=("parallel",),
            # ~62.5% of this generation's per-core VMEM (40 MiB v7x, 80 MiB v5e/v6e).
            vmem_limit_bytes=int(vmem_cap * 5 // 8),
        ),
        cost_estimate=cost,
    )(x, target2d)

    # Rows >= n of the ragged last tile were computed from stale VMEM contents;
    # they are discarded here and are never reduced over inside the kernel.
    return jnp.mean(per_row[:n, 0])


def _reference(x, target, smoothing):
    confidence = 1.0 - smoothing
    logprobs = jax.nn.log_softmax(x.astype(jnp.float32), axis=-1)
    nll = -jnp.take_along_axis(logprobs, target[:, None], axis=-1)[:, 0]
    smooth = -jnp.mean(logprobs, axis=-1)
    return jnp.mean(confidence * nll + smoothing * smooth)


if __name__ == "__main__":
    key = jax.random.PRNGKey(0)
    kx, kt, kx2, kt2 = jax.random.split(key, 4)
    smoothing = 0.1

    # f32 logits, N NOT a multiple of the tile -> exercises the ragged last block.
    N, C = 20, 32
    x = jax.random.normal(kx, (N, C), dtype=jnp.float32)
    target = jax.random.randint(kt, (N,), 0, C, dtype=jnp.int32)
    loss = jax.block_until_ready(label_smoothing_loss(x, target, smoothing=smoothing))
    ref = _reference(x, target, smoothing)
    assert jnp.allclose(loss, ref, atol=1e-5, rtol=1e-5), (loss, ref)

    # bf16 logits path (halves HBM traffic; in-kernel math stays f32).
    N2, C2 = 16, 32
    x_bf16 = jax.random.normal(kx2, (N2, C2), dtype=jnp.float32).astype(jnp.bfloat16)
    target2 = jax.random.randint(kt2, (N2,), 0, C2, dtype=jnp.int32)
    loss_bf16 = jax.block_until_ready(
        label_smoothing_loss(x_bf16, target2, smoothing=smoothing))
    ref_bf16 = _reference(x_bf16.astype(jnp.float32), target2, smoothing)
    assert jnp.allclose(loss_bf16, ref_bf16, atol=1e-4, rtol=1e-4), (loss_bf16, ref_bf16)

    print("KERNEL_OK")
</pallas_src>

<mosaic_0001>
module attributes {stable_mosaic.version = 11 : i64} {
  func.func @_label_smoothing_kernel(%arg0: i32, %arg1: memref<8x32xf32, #tpu.memory_space<vmem>>, %arg2: memref<8x1xi32, #tpu.memory_space<vmem>>, %arg3: memref<8x1xf32, #tpu.memory_space<vmem>>) attributes {dimension_semantics = [#tpu.dimension_semantics<parallel>], iteration_bounds = array<i64: 3>, scalar_prefetch = 0 : i64, scratch_operands = 0 : i64, tpu.core_type = #tpu.core_type<tc>, window_params = [{transform_indices = @transform_0, window_bounds = array<i64: 8, 32>}, {transform_indices = @transform_1, window_bounds = array<i64: 8, 1>}, {transform_indices = @transform_2, window_bounds = array<i64: 8, 1>}]} {
    %c0 = arith.constant 0 : index
    %c0_0 = arith.constant 0 : index
    %0 = vector.load %arg1[%c0, %c0_0] : memref<8x32xf32, #tpu.memory_space<vmem>>, vector<8x32xf32>
    %cst = arith.constant dense<0xFF800000> : vector<8xf32>
    %1 = vector.multi_reduction <maximumf>, %0, %cst [1] : vector<8x32xf32> to vector<8xf32>
    %2 = vector.shape_cast %1 : vector<8xf32> to vector<8x1xf32>
    %3 = vector.broadcast %2 : vector<8x1xf32> to vector<8x32xf32>
    %4 = arith.subf %0, %3 : vector<8x32xf32>
    %5 = math.exp %4 : vector<8x32xf32>
    %cst_1 = arith.constant dense<0.000000e+00> : vector<8xf32>
    %6 = vector.multi_reduction <add>, %5, %cst_1 [1] : vector<8x32xf32> to vector<8xf32>
    %7 = vector.shape_cast %6 : vector<8xf32> to vector<8x1xf32>
    %8 = math.log %7 : vector<8x1xf32>
    %c0_2 = arith.constant 0 : index
    %c0_3 = arith.constant 0 : index
    %9 = vector.load %arg2[%c0_2, %c0_3] : memref<8x1xi32, #tpu.memory_space<vmem>>, vector<8x1xi32>
    %10 = tpu.iota {dimensions = array<i32: 1>} : vector<8x32xi32>
    %11 = vector.broadcast %9 : vector<8x1xi32> to vector<8x32xi32>
    %12 = arith.cmpi eq, %10, %11 : vector<8x32xi32>
    %cst_4 = arith.constant 0.000000e+00 : f32
    %13 = vector.broadcast %cst_4 : f32 to vector<8x32xf32>
    %14 = arith.select %12, %4, %13 : vector<8x32xi1>, vector<8x32xf32>
    %cst_5 = arith.constant dense<0.000000e+00> : vector<8xf32>
    %15 = vector.multi_reduction <add>, %14, %cst_5 [1] : vector<8x32xf32> to vector<8xf32>
    %16 = vector.shape_cast %15 : vector<8xf32> to vector<8x1xf32>
    %cst_6 = arith.constant dense<0.000000e+00> : vector<8xf32>
    %17 = vector.multi_reduction <add>, %4, %cst_6 [1] : vector<8x32xf32> to vector<8xf32>
    %18 = vector.shape_cast %17 : vector<8xf32> to vector<8x1xf32>
    %19 = arith.subf %8, %16 : vector<8x1xf32>
    %cst_7 = arith.constant 3.125000e-02 : f32
    %20 = vector.broadcast %cst_7 : f32 to vector<8x1xf32>
    %21 = arith.mulf %18, %20 : vector<8x1xf32>
    %22 = arith.subf %8, %21 : vector<8x1xf32>
    %cst_8 = arith.constant 0.899999976 : f32
    %23 = vector.broadcast %cst_8 : f32 to vector<8x1xf32>
    %24 = arith.mulf %23, %19 : vector<8x1xf32>
    %cst_9 = arith.constant 1.000000e-01 : f32
    %25 = vector.broadcast %cst_9 : f32 to vector<8x1xf32>
    %26 = arith.mulf %25, %22 : vector<8x1xf32>
    %27 = arith.addf %24, %26 : vector<8x1xf32>
    %c0_10 = arith.constant 0 : index
    %c0_11 = arith.constant 0 : index
    %28 = vector.load %arg3[%c0_10, %c0_11] : memref<8x1xf32, #tpu.memory_space<vmem>>, vector<8x1xf32>
    tpu.vector_store %arg3[%c0_10, %c0_11], %27 {strides = array<i32>} : memref<8x1xf32, #tpu.memory_space<vmem>>, vector<8x1xf32>,
    return
  }
  func.func @transform_0(%arg0: i32) -> (i32, i32) {
    %c0_i32 = arith.constant 0 : i32
    %c0_i32_0 = arith.constant 0 : i32
    return %arg0, %c0_i32 : i32, i32
  }
  func.func @transform_1(%arg0: i32) -> (i32, i32) {
    %c0_i32 = arith.constant 0 : i32
    %c0_i32_0 = arith.constant 0 : i32
    return %arg0, %c0_i32 : i32, i32
  }
  func.func @transform_2(%arg0: i32) -> (i32, i32) {
    %c0_i32 = arith.constant 0 : i32
    %c0_i32_0 = arith.constant 0 : i32
    return %arg0, %c0_i32 : i32, i32
  }
}

</mosaic_0001>

<llo_original>
// kernel: tpu_custom_call.1
$region0: #{tpu_custom_call.1}
  #allocation0 [shape = 'u32[]', space=smem, size = 0x4, offset = 0x4, fixed_abs, tag = 'smem constant byte address 0x4 - core index']
  #allocation1 [shape = 'u32[72,128]{1,0:T(1,128)}', space=vmem, size = 0x9000, scoped, tag = 'internal scratch']
  %s0 = inlined_call_operand.vmem [shape: f32[20,32], index: 0, kind: input, shape index: {}]
  %s1 = inlined_call_operand.vmem [shape: s32[20,1], index: 1, kind: input, shape index: {}]
  %s2 = inlined_call_operand.vmem [shape: f32[24,1], index: 2, kind: output, shape index: {}]
  %s3 = sld [smem:[#allocation0]]
  $region41: #{tpu_custom_call.1} parent=0
    _
  %s5 = ssub.s32 1, %s3
  %s6 = scalar_select 0, %s5, %s3
  loop: start=0, step=1, limit=5
  $region2: #{tpu_custom_call.1} parent=0 // loop_pre_header
    _
  $region3: #{tpu_custom_call.1} parent=0 // loop_header
    %s8 = sphi 0, %s12
    %p9 = scmp.ge.s32.totalorder %s8, 5
    %s18 = sphi 0, %s20
    %s21 = sphi 0, %s18
    %s22 = sphi 0, %s21
    %s38 = sphi 0, %s22
    %s44 = sphi 0, %s46
    %s47 = sphi 0, %s44
    %s48 = sphi 0, %s47
    %s64 = sphi 0, %s48
    %s70 = sphi 0, %s72
    %s73 = sphi 0, %s70
    %s74 = sphi 0, %s73
    %s90 = sphi 0, %s74
  $region4: #{tpu_custom_call.1} parent=0 // loop_header_branch
    %11 = sbr.rel (%p9) target = $region8
  $region5: #{tpu_custom_call.1} parent=0 // loop_body
    %s13 = ssub.s32 %s8, 1
    %s14 = ssub.s32 %s8, 2
    %s15 = sadd.s32 %s8, 1
    %s16 = ssub.s32 %s8, %s15
    %p17 = scmp.eq.s32.totalorder %s16, 0
    %s19 = sadd.s32 %s18, 1
    %s20 = scalar_select %p17, %s18, %s19
    %p23 = pneg %p17
    %p24 = scmp.eq.s32.totalorder %s8, 2
    %p25 = por %p23, %p24
    %p26 = scmp.ne.s32.totalorder %s18, %s21
    %p27 = scmp.eq.s32.totalorder %s8, 0
    %p28 = por %p26, %p27
    %p29 = scmp.ne.s32.totalorder %s18, %s21
    %p30 = scmp.eq.s32.totalorder %s13, 2
    %p31 = por %p29, %p30
    %p32 = scmp.ne.s32.totalorder %s21, %s22
    %p33 = scmp.eq.s32.totalorder %s13, 0
    %p34 = por %p32, %p33
    %p35 = scmp.ne.s32.totalorder %s21, %s22
    %p36 = scmp.eq.s32.totalorder %s14, 2
    %p37 = por %p35, %p36
    %p39 = scmp.ne.s32.totalorder %s22, %s38
    %p40 = scmp.eq.s32.totalorder %s14, 0
    %p41 = por %p39, %p40
    %s42 = ssub.s32 %s8, %s15
    %p43 = scmp.eq.s32.totalorder %s42, 0
    %s45 = sadd.s32 %s44, 1
    %s46 = scalar_select %p43, %s44, %s45
    %p49 = pneg %p43
    %p50 = scmp.eq.s32.totalorder %s8, 2
    %p51 = por %p49, %p50
    %p52 = scmp.ne.s32.totalorder %s44, %s47
    %p53 = scmp.eq.s32.totalorder %s8, 0
    %p54 = por %p52, %p53
    %p55 = scmp.ne.s32.totalorder %s44, %s47
    %p56 = scmp.eq.s32.totalorder %s13, 2
    %p57 = por %p55, %p56
    %p58 = scmp.ne.s32.totalorder %s47, %s48
    %p59 = scmp.eq.s32.totalorder %s13, 0
    %p60 = por %p58, %p59
    %p61 = scmp.ne.s32.totalorder %s47, %s48
    %p62 = scmp.eq.s32.totalorder %s14, 2
    %p63 = por %p61, %p62
    %p65 = scmp.ne.s32.totalorder %s48, %s64
    %p66 = scmp.eq.s32.totalorder %s14, 0
    %p67 = por %p65, %p66
    %s68 = ssub.s32 %s8, %s15
    %p69 = scmp.eq.s32.totalorder %s68, 0
    %s71 = sadd.s32 %s70, 1
    %s72 = scalar_select %p69, %s70, %s71
    %p75 = pneg %p69
    %p76 = scmp.eq.s32.totalorder %s8, 2
    %p77 = por %p75, %p76
    %p78 = scmp.ne.s32.totalorder %s70, %s73
    %p79 = scmp.eq.s32.totalorder %s8, 0
    %p80 = por %p78, %p79
    %p81 = scmp.ne.s32.totalorder %s70, %s73
    %p82 = scmp.eq.s32.totalorder %s13, 2
    %p83 = por %p81, %p82
    %p84 = scmp.ne.s32.totalorder %s73, %s74
    %p85 = scmp.eq.s32.totalorder %s13, 0
    %p86 = por %p84, %p85
    %p87 = scmp.ne.s32.totalorder %s73, %s74
    %p88 = scmp.eq.s32.totalorder %s14, 2
    %p89 = por %p87, %p88
    %p91 = scmp.ne.s32.totalorder %s74, %s90
    %p92 = scmp.eq.s32.totalorder %s14, 0
    %p93 = por %p91, %p92
    %p94 = scmp.le.s32.totalorder 1, %s8
    %p95 = scmp.lt.s32.totalorder %s8, 4
    %p96 = pnand %p94, %p95
    %p97 = pneg %p96
    // Predicated region
    $region9: #{tpu_custom_call.1} parent=5 // pred_check
      _
    $region10: #{tpu_custom_call.1} parent=5 // pred_check_branch
      %99 = sbr.rel (%p96) target = $region12
    $region11: #{tpu_custom_call.1} parent=5 // pred_region
      %s100 = ssub.s32 %s8, 1
    $region12: #{tpu_custom_call.1} parent=5 // pred_fallthru
      _
    %p101 = scmp.lt.s32.totalorder %s8, 3
    // Predicated region
    $region13: #{tpu_custom_call.1} parent=5 // pred_check
      %p102 = pneg %p101
    $region14: #{tpu_custom_call.1} parent=5 // pred_check_branch
      %104 = sbr.rel (%p102) target = $region16
    $region15: #{tpu_custom_call.1} parent=5 // pred_region
      // Predicated region
      $region17: #{tpu_custom_call.1} parent=15 // pred_check
        %p105 = pneg %p28
      $region18: #{tpu_custom_call.1} parent=15 // pred_check_branch
        %107 = sbr.rel (%p105) target = $region20
      $region19: #{tpu_custom_call.1} parent=15 // pred_region
        %p108 = scmp.lt.s32.totalorder %s8, 2
        %s109 = scalar_select %p108, %s8, 2
        %s110 = smul.addr %s109, 8
        %s111 = scalar_lea.vmem %s0, %s110
      $region20: #{tpu_custom_call.1} parent=15 // pred_fallthru
        _
      // Predicated region
      $region21: #{tpu_custom_call.1} parent=15 // pred_check
        %p112 = pneg %p54
      $region22: #{tpu_custom_call.1} parent=15 // pred_check_branch
        %114 = sbr.rel (%p112) target = $region24
      $region23: #{tpu_custom_call.1} parent=15 // pred_region
        %p115 = scmp.lt.s32.totalorder %s8, 2
        %s116 = scalar_select %p115, %s8, 2
        %s117 = smul.addr %s116, 8
        %s118 = scalar_lea.vmem %s1, %s117
      $region24: #{tpu_custom_call.1} parent=15 // pred_fallthru
        _
    $region16: #{tpu_custom_call.1} parent=5 // pred_fallthru
      _
    %p119 = scmp.le.s32.totalorder 1, %s8
    %p120 = scmp.lt.s32.totalorder %s8, 4
    %p121 = pnand %p119, %p120
    %p122 = pneg %p121
    // Predicated region
    $region25: #{tpu_custom_call.1} parent=5 // pred_check
      _
    $region26: #{tpu_custom_call.1} parent=5 // pred_check_branch
      %124 = sbr.rel (%p121) target = $region28
    $region27: #{tpu_custom_call.1} parent=5 // pred_region
      %s125 = ssub.s32 %s8, 1
      %p126 = scmp.lt.s32.totalorder %s13, 2
      %s127 = scalar_select %p126, %s13, 2
      %s128 = smul.addr %s127, 8
      %s129 = scalar_lea.vmem %s0, %s128
      %p130 = pneg %p34
      %p131 = pneg %p31
      %p132 = scmp.lt.s32.totalorder %s13, 2
      %s133 = scalar_select %p132, %s13, 2
      %s134 = smul.addr %s133, 8
      %s135 = scalar_lea.vmem %s1, %s134
      %p136 = pneg %p60
      %p137 = pneg %p57
      %p138 = pneg %p86
      %p139 = pneg %p83
      %p140 = scmp.lt.s32.totalorder %s13, 2
      %s141 = scalar_select %p140, %s13, 2
      %s142 = smul.addr %s141, 8
      %s143 = scalar_lea.vmem %s2, %s142
      %p144 = scmp.lt.s32.totalorder %s13, 2
      %s145 = scalar_select %p144, %s13, 2
      %s146 = smul.addr %s145, 8
      %s147 = scalar_lea.vmem %s0, %s146
      %p148 = scmp.lt.s32.totalorder %s13, 2
      %s149 = scalar_select %p148, %s13, 2
      %s150 = smul.addr %s149, 8
      %s151 = scalar_lea.vmem %s1, %s150
      %p152 = scmp.lt.s32.totalorder %s13, 2
      %s153 = scalar_select %p152, %s13, 2
      %s154 = smul.addr %s153, 8
      %s155 = scalar_lea.vmem %s2, %s154
      %v156 = vld [vmem:[%s147] sm:$0xff]
      %vm157 = vcmask 261120
      %v158 = vsel %vm157, %v156, -inf
      %159 = vmax.xlane.f32.xlu0 %v158
      %v160 = vpop.xlane.xlu0 %159
      %v161 = vsub.f32 %v156, %v160
      %v162 = vmul.f32 %v161, 1.442695
      %v163 = vpow.pop %v162
      %v164 = vsel %vm157, %v163, 0.0
      %165 = vadd.xlane.f32.xlu0 %v164
      %v166 = vpop.xlane.xlu0 %165
      %v167 = vlog2.pop %v166
      %v168 = vmul.f32 %v167, 0.6931472
      %v169 = vld [vmem:[%s151] sm:$0xff]
      %v170 = vlaneseq
      %v171 = vand.u32 %v170, 127
      %172 = vset.pattern.permute.xlu0 0
      %173 = vperm.xlu0 %172, %v169
      %v174 = vpop.permute.xlu0 %173
      %vm175 = vcmp.eq.s32.totalorder %v171, %v174
      %v176 = vsel %vm175, %v161, 0.0
      %v177 = vsel %vm157, %v176, 0.0
      %178 = vadd.xlane.f32.xlu0 %v177
      %v179 = vpop.xlane.xlu0 %178
      %v180 = vsel %vm157, %v161, 0.0
      %181 = vadd.xlane.f32.xlu0 %v180
      %v182 = vpop.xlane.xlu0 %181
      %v183 = vsub.f32 %v168, %v179
      %v184 = vmul.f32 %v182, 0.03125
      %v185 = vsub.f32 %v168, %v184
      %v186 = vmul.f32 %v183, 0.9
      %v187 = vmul.f32 %v185, 0.1
      %v188 = vadd.f32 %v186, %v187
      %vm189 = vcmask 7168
      %190 = vst.msk [vmem:[%s155] sm:$0xff] %vm189, %v188
      %p191 = scmp.lt.s32.totalorder %s13, 2
      %s192 = scalar_select %p191, %s13, 2
      %s193 = smul.addr %s192, 8
      %s194 = scalar_lea.vmem %s2, %s193
      // Predicated region
      $region29: #{tpu_custom_call.1} parent=27 // pred_check
        %p195 = pneg %p83
      $region30: #{tpu_custom_call.1} parent=27 // pred_check_branch
        %197 = sbr.rel (%p195) target = $region32
      $region31: #{tpu_custom_call.1} parent=27 // pred_region
        _
      $region32: #{tpu_custom_call.1} parent=27 // pred_fallthru
        _
    $region28: #{tpu_custom_call.1} parent=5 // pred_fallthru
      _
    %p198 = scmp.le.s32.totalorder 2, %s8
    // Predicated region
    $region33: #{tpu_custom_call.1} parent=5 // pred_check
      %p199 = pneg %p198
    $region34: #{tpu_custom_call.1} parent=5 // pred_check_branch
      %201 = sbr.rel (%p199) target = $region36
    $region35: #{tpu_custom_call.1} parent=5 // pred_region
      %s202 = ssub.s32 %s8, 2
      // Predicated region
      $region37: #{tpu_custom_call.1} parent=35 // pred_check
        %p203 = pneg %p89
      $region38: #{tpu_custom_call.1} parent=35 // pred_check_branch
        %205 = sbr.rel (%p203) target = $region40
      $region39: #{tpu_custom_call.1} parent=35 // pred_region
        %p206 = scmp.lt.s32.totalorder %s14, 2
        %s207 = scalar_select %p206, %s14, 2
        %s208 = smul.addr %s207, 8
        %s209 = scalar_lea.vmem %s2, %s208
      $region40: #{tpu_custom_call.1} parent=35 // pred_fallthru
        _
    $region36: #{tpu_custom_call.1} parent=5 // pred_fallthru
      _
  $region6: #{tpu_custom_call.1} parent=0 // loop_footer
    %s12 = sadd.s32 1, %s8
  $region7: #{tpu_custom_call.1} parent=0 // loop_footer_branch
    %7 = sbr.rel target = $region3
  $region8: #{tpu_custom_call.1} parent=0 // loop_exit
    _

</llo_original>
